<compile_context>
chip_gen: v6e
topology: v6e:2x2x1
jax: 0.10.0
libtpu: 0.0.40
codegen_flags: <defaults>
</compile_context>

<pallas_src>
import functools

import jax
import jax.numpy as jnp
from jax.experimental import pallas as pl
from jax.experimental.pallas import tpu as pltpu

IN_DIM = 500          # model feature width (PyTorch spec)
PAD_IN = 512          # lane-aligned feature width used inside the kernel
HID_DIM = 128
LATENT_DIM = 2        # module hard-codes latent_dims = 2
TILE_B_DEFAULT = 512  # rows per grid step


def _round_up(n: int, m: int) -> int:
    return ((n + m - 1) // m) * m


def autoencoder_kernel(x_ref,
                       w1_ref, b1_ref,
                       w23_ref, b23_ref,
                       w4_ref, b4_ref,
                       out_ref):
    # encoder: Linear(512->128) + ReLU   (512 = zero-padded 500; padded cols hit zero rows of w1)
    h1 = jnp.dot(x_ref[...], w1_ref[...], preferred_element_type=jnp.float32) + b1_ref[...]
    h1 = jnp.maximum(h1, 0.0)
    # fused bottleneck: Linear(128->2) o Linear(2->128)  ==  one 128x128 GEMM, then decoder ReLU
    h2 = jnp.dot(h1, w23_ref[...], preferred_element_type=jnp.float32) + b23_ref[...]
    h2 = jnp.maximum(h2, 0.0)
    # decoder: Linear(128->512)  (padded output cols are zero, sliced off in the wrapper)
    out_ref[...] = (jnp.dot(h2, w4_ref[...], preferred_element_type=jnp.float32)
                    + b4_ref[...]).astype(out_ref.dtype)


@functools.partial(jax.jit, static_argnames=("tile_b",))
def autoencoder_forward(x, params, *, tile_b=TILE_B_DEFAULT):
    (w1, b1, w2, b2, w3, b3, w4, b4) = params
    B = x.shape[0]

    # --- trace-time layout prep (all static shapes) ---
    tb = min(tile_b, _round_up(B, 8))          # rows per tile, multiple of 8
    b_pad = _round_up(B, tb)                   # batch padded to a whole number of tiles
    n_tiles = b_pad // tb

    x_p = jnp.pad(x, ((0, b_pad - B), (0, PAD_IN - IN_DIM)))
    w1_p = jnp.pad(w1, ((0, PAD_IN - IN_DIM), (0, 0)))   # zero rows -> padded inputs inert
    w4_p = jnp.pad(w4, ((0, 0), (0, PAD_IN - IN_DIM)))   # zero cols -> padded outputs are 0
    b4_p = jnp.pad(b4, ((0, 0), (0, PAD_IN - IN_DIM)))
    # fuse the 2-wide latent bottleneck (no nonlinearity between the two Linears)
    w23 = jnp.dot(w2, w3, precision=jax.lax.Precision.HIGHEST)           # (128, 128)
    b23 = jnp.dot(b2, w3, precision=jax.lax.Precision.HIGHEST) + b3       # (1, 128)

    def weight_spec(shape):
        return pl.BlockSpec(shape, lambda i: (0, 0))     # VMEM-resident across grid steps

    flops = 2 * b_pad * (PAD_IN * HID_DIM + HID_DIM * HID_DIM + HID_DIM * PAD_IN)
    bytes_accessed = 4 * (2 * b_pad * PAD_IN                       # x in + out
                          + 2 * PAD_IN * HID_DIM + HID_DIM * HID_DIM
                          + 2 * HID_DIM + 2 * PAD_IN)              # weights + biases

    out_p = pl.pallas_call(
        autoencoder_kernel,
        out_shape=jax.ShapeDtypeStruct((b_pad, PAD_IN), jnp.float32),
        grid=(n_tiles,),
        in_specs=[
            pl.BlockSpec((tb, PAD_IN), lambda i: (i, 0)),   # x tile (double-buffered)
            weight_spec((PAD_IN, HID_DIM)),                 # w1
            weight_spec((1, HID_DIM)),                      # b1
            weight_spec((HID_DIM, HID_DIM)),                # w23 (fused bottleneck)
            weight_spec((1, HID_DIM)),                      # b23
            weight_spec((HID_DIM, PAD_IN)),                 # w4
            weight_spec((1, PAD_IN)),                       # b4
        ],
        out_specs=pl.BlockSpec((tb, PAD_IN), lambda i: (i, 0)),
        compiler_params=pltpu.CompilerParams(
            dimension_semantics=("parallel",)),             # megacore on v7x; harmless elsewhere
        cost_estimate=pl.CostEstimate(
            flops=flops, transcendentals=0, bytes_accessed=bytes_accessed),
    )(x_p, w1_p, b1, w23, b23, w4_p, b4_p)

    return out_p[:B, :IN_DIM]


def init_params(key):
    """Deterministic parameter init (PyTorch-style uniform bounds)."""
    def linear(k, fan_in, fan_out):
        kw, kb = jax.random.split(k)
        bound = 1.0 / jnp.sqrt(fan_in)
        # stored as (in, out), i.e. transpose of torch's (out, in)
        w = jax.random.uniform(kw, (fan_in, fan_out), jnp.float32, -bound, bound)
        b = jax.random.uniform(kb, (1, fan_out), jnp.float32, -bound, bound)
        return w, b

    k1, k2, k3, k4 = jax.random.split(key, 4)
    w1, b1 = linear(k1, IN_DIM, HID_DIM)      # encoder[0]
    w2, b2 = linear(k2, HID_DIM, LATENT_DIM)  # encoder[2]
    w3, b3 = linear(k3, LATENT_DIM, HID_DIM)  # decoder[0]
    w4, b4 = linear(k4, HID_DIM, IN_DIM)      # decoder[2]
    return (w1, b1, w2, b2, w3, b3, w4, b4)


def reference_forward(x, params):
    """Unfused, unpadded pure-JAX reference matching the PyTorch module exactly."""
    (w1, b1, w2, b2, w3, b3, w4, b4) = params
    h1 = jnp.maximum(x @ w1 + b1, 0.0)
    z = h1 @ w2 + b2
    h2 = jnp.maximum(z @ w3 + b3, 0.0)
    return h2 @ w4 + b4


if __name__ == "__main__":
    key = jax.random.PRNGKey(0)
    k_x, k_p = jax.random.split(key)

    B = 8
    x = jax.random.normal(k_x, (B, IN_DIM), dtype=jnp.float32)
    params = init_params(k_p)

    out = autoencoder_forward(x, params)
    out = jax.block_until_ready(out)

    ref = reference_forward(x, params)
    assert out.shape == (B, IN_DIM)
    # fusing the 2-wide bottleneck reassociates sums -> allow fp-rounding-level slack
    assert jnp.allclose(out, ref, atol=1e-3, rtol=1e-3), float(jnp.max(jnp.abs(out - ref)))

    print("KERNEL_OK")
</pallas_src>

<mosaic_0001>
module attributes {stable_mosaic.version = 11 : i64} {
  func.func @autoencoder_kernel(%arg0: i32, %arg1: memref<8x512xf32, #tpu.memory_space<vmem>>, %arg2: memref<512x128xf32, #tpu.memory_space<vmem>>, %arg3: memref<1x128xf32, #tpu.memory_space<vmem>>, %arg4: memref<128x128xf32, #tpu.memory_space<vmem>>, %arg5: memref<1x128xf32, #tpu.memory_space<vmem>>, %arg6: memref<128x512xf32, #tpu.memory_space<vmem>>, %arg7: memref<1x512xf32, #tpu.memory_space<vmem>>, %arg8: memref<8x512xf32, #tpu.memory_space<vmem>>) attributes {dimension_semantics = [#tpu.dimension_semantics<parallel>], iteration_bounds = array<i64: 1>, scalar_prefetch = 0 : i64, scratch_operands = 0 : i64, tpu.core_type = #tpu.core_type<tc>, window_params = [{transform_indices = @transform_0, window_bounds = array<i64: 8, 512>}, {pipeline_mode = #tpu.pipeline_mode<synchronous>, transform_indices = @transform_1, window_bounds = array<i64: 512, 128>}, {pipeline_mode = #tpu.pipeline_mode<synchronous>, transform_indices = @transform_2, window_bounds = array<i64: 1, 128>}, {pipeline_mode = #tpu.pipeline_mode<synchronous>, transform_indices = @transform_3, window_bounds = array<i64: 128, 128>}, {pipeline_mode = #tpu.pipeline_mode<synchronous>, transform_indices = @transform_4, window_bounds = array<i64: 1, 128>}, {pipeline_mode = #tpu.pipeline_mode<synchronous>, transform_indices = @transform_5, window_bounds = array<i64: 128, 512>}, {pipeline_mode = #tpu.pipeline_mode<synchronous>, transform_indices = @transform_6, window_bounds = array<i64: 1, 512>}, {transform_indices = @transform_7, window_bounds = array<i64: 8, 512>}]} {
    %c0 = arith.constant 0 : index
    %c0_0 = arith.constant 0 : index
    %0 = vector.load %arg1[%c0, %c0_0] : memref<8x512xf32, #tpu.memory_space<vmem>>, vector<8x512xf32>
    %c0_1 = arith.constant 0 : index
    %c0_2 = arith.constant 0 : index
    %1 = vector.load %arg2[%c0_1, %c0_2] : memref<512x128xf32, #tpu.memory_space<vmem>>, vector<512x128xf32>
    %cst = arith.constant dense<0.000000e+00> : vector<8x128xf32>
    %2 = tpu.matmul %0, %1, %cst {dimension_numbers = #tpu.dot_dimension_numbers<[1], [0], [0], [1], [0, 0, 1, 1], [], []>} : vector<8x512xf32>, vector<512x128xf32>, vector<8x128xf32> -> vector<8x128xf32>
    %c0_3 = arith.constant 0 : index
    %c0_4 = arith.constant 0 : index
    %3 = vector.load %arg3[%c0_3, %c0_4] : memref<1x128xf32, #tpu.memory_space<vmem>>, vector<1x128xf32>
    %4 = vector.broadcast %3 : vector<1x128xf32> to vector<8x128xf32>
    %5 = arith.addf %2, %4 : vector<8x128xf32>
    %cst_5 = arith.constant 0.000000e+00 : f32
    %6 = vector.broadcast %cst_5 : f32 to vector<8x128xf32>
    %7 = arith.maximumf %5, %6 : vector<8x128xf32>
    %c0_6 = arith.constant 0 : index
    %c0_7 = arith.constant 0 : index
    %8 = vector.load %arg4[%c0_6, %c0_7] : memref<128x128xf32, #tpu.memory_space<vmem>>, vector<128x128xf32>
    %cst_8 = arith.constant dense<0.000000e+00> : vector<8x128xf32>
    %9 = tpu.matmul %7, %8, %cst_8 {dimension_numbers = #tpu.dot_dimension_numbers<[1], [0], [0], [1], [0, 0, 1, 1], [], []>} : vector<8x128xf32>, vector<128x128xf32>, vector<8x128xf32> -> vector<8x128xf32>
    %c0_9 = arith.constant 0 : index
    %c0_10 = arith.constant 0 : index
    %10 = vector.load %arg5[%c0_9, %c0_10] : memref<1x128xf32, #tpu.memory_space<vmem>>, vector<1x128xf32>
    %11 = vector.broadcast %10 : vector<1x128xf32> to vector<8x128xf32>
    %12 = arith.addf %9, %11 : vector<8x128xf32>
    %cst_11 = arith.constant 0.000000e+00 : f32
    %13 = vector.broadcast %cst_11 : f32 to vector<8x128xf32>
    %14 = arith.maximumf %12, %13 : vector<8x128xf32>
    %c0_12 = arith.constant 0 : index
    %c0_13 = arith.constant 0 : index
    %15 = vector.load %arg6[%c0_12, %c0_13] : memref<128x512xf32, #tpu.memory_space<vmem>>, vector<128x512xf32>
    %cst_14 = arith.constant dense<0.000000e+00> : vector<8x512xf32>
    %16 = tpu.matmul %14, %15, %cst_14 {dimension_numbers = #tpu.dot_dimension_numbers<[1], [0], [0], [1], [0, 0, 1, 1], [], []>} : vector<8x128xf32>, vector<128x512xf32>, vector<8x512xf32> -> vector<8x512xf32>
    %c0_15 = arith.constant 0 : index
    %c0_16 = arith.constant 0 : index
    %17 = vector.load %arg7[%c0_15, %c0_16] : memref<1x512xf32, #tpu.memory_space<vmem>>, vector<1x512xf32>
    %18 = vector.broadcast %17 : vector<1x512xf32> to vector<8x512xf32>
    %19 = arith.addf %16, %18 : vector<8x512xf32>
    %c0_17 = arith.constant 0 : index
    %c0_18 = arith.constant 0 : index
    %20 = vector.load %arg8[%c0_17, %c0_18] : memref<8x512xf32, #tpu.memory_space<vmem>>, vector<8x512xf32>
    tpu.vector_store %arg8[%c0_17, %c0_18], %19 {strides = array<i32>} : memref<8x512xf32, #tpu.memory_space<vmem>>, vector<8x512xf32>,
    return
  }
  func.func @transform_0(%arg0: i32) -> (i32, i32) {
    %c0_i32 = arith.constant 0 : i32
    %c0_i32_0 = arith.constant 0 : i32
    return %arg0, %c0_i32 : i32, i32
  }
  func.func @transform_1(%arg0: i32) -> (i32, i32) {
    %c0_i32 = arith.constant 0 : i32
    %c0_i32_0 = arith.constant 0 : i32
    %c0_i32_1 = arith.constant 0 : i32
    return %c0_i32, %c0_i32_0 : i32, i32
  }
  func.func @transform_2(%arg0: i32) -> (i32, i32) {
    %c0_i32 = arith.constant 0 : i32
    %c0_i32_0 = arith.constant 0 : i32
    %c0_i32_1 = arith.constant 0 : i32
    return %c0_i32, %c0_i32_0 : i32, i32
  }
  func.func @transform_3(%arg0: i32) -> (i32, i32) {
    %c0_i32 = arith.constant 0 : i32
    %c0_i32_0 = arith.constant 0 : i32
    %c0_i32_1 = arith.constant 0 : i32
    return %c0_i32, %c0_i32_0 : i32, i32
  }
  func.func @transform_4(%arg0: i32) -> (i32, i32) {
    %c0_i32 = arith.constant 0 : i32
    %c0_i32_0 = arith.constant 0 : i32
    %c0_i32_1 = arith.constant 0 : i32
    return %c0_i32, %c0_i32_0 : i32, i32
  }
  func.func @transform_5(%arg0: i32) -> (i32, i32) {
    %c0_i32 = arith.constant 0 : i32
    %c0_i32_0 = arith.constant 0 : i32
    %c0_i32_1 = arith.constant 0 : i32
    return %c0_i32, %c0_i32_0 : i32, i32
  }
  func.func @transform_6(%arg0: i32) -> (i32, i32) {
    %c0_i32 = arith.constant 0 : i32
    %c0_i32_0 = arith.constant 0 : i32
    %c0_i32_1 = arith.constant 0 : i32
    return %c0_i32, %c0_i32_0 : i32, i32
  }
  func.func @transform_7(%arg0: i32) -> (i32, i32) {
    %c0_i32 = arith.constant 0 : i32
    %c0_i32_0 = arith.constant 0 : i32
    return %arg0, %c0_i32 : i32, i32
  }
}

</mosaic_0001>

<llo_original>
// kernel: autoencoder_forward.1
$region0: #{autoencoder_forward.1}
  #allocation0 [shape = 'u32[]', space=smem, size = 0x4, offset = 0x4, fixed_abs, tag = 'smem constant byte address 0x4 - core index']
  #allocation1 [shape = 'u32[144,128]{1,0:T(1,128)}', space=vmem, size = 0x12000, scoped, tag = 'internal scratch']
  %s0 = inlined_call_operand.vmem [shape: f32[8,512], index: 0, kind: input, shape index: {}]
  %s1 = inlined_call_operand.vmem [shape: f32[512,128], index: 1, kind: input, shape index: {}]
  %s2 = inlined_call_operand.vmem [shape: f32[1,128], index: 2, kind: input, shape index: {}]
  %s3 = inlined_call_operand.vmem [shape: f32[128,128], index: 3, kind: input, shape index: {}]
  %s4 = inlined_call_operand.vmem [shape: f32[1,128], index: 4, kind: input, shape index: {}]
  %s5 = inlined_call_operand.vmem [shape: f32[128,512], index: 5, kind: input, shape index: {}]
  %s6 = inlined_call_operand.vmem [shape: f32[1,512], index: 6, kind: input, shape index: {}]
  %s7 = inlined_call_operand.hbm [shape: f32[8,512], index: 7, kind: output, shape index: {}]
  %s8 = sld [smem:[#allocation0]]
  $region38: #{autoencoder_forward.1} parent=0
    _
  %s10 = ssub.s32 1, %s8
  %s11 = scalar_select 0, %s10, %s8
  $region1: #{autoencoder_forward.1} parent=0
    #allocation2 [shape = 'u8[16384]{0}', space=vmem, size = 0x4000, scoped, tag = 'output window, operand 0, single buffered']
    #allocation3 [shape = 's32[1]{0}', space=sflag, size = 0x4, scoped, tag = 'scoped memory for autoencoder_forward.1']
    %12 = vsyncpa [#allocation3], 0
    // Predicated region
    $region2: #{autoencoder_forward.1} parent=1 // pred_check
      _
    $region3: #{autoencoder_forward.1} parent=1 // pred_check_branch
      %14 = sbr.rel (0) target = $region5
    $region4: #{autoencoder_forward.1} parent=1 // pred_region
      _
    $region5: #{autoencoder_forward.1} parent=1 // pred_fallthru
      _
    // Predicated region
    $region6: #{autoencoder_forward.1} parent=1 // pred_check
      _
    $region7: #{autoencoder_forward.1} parent=1 // pred_check_branch
      %16 = sbr.rel (0) target = $region9
    $region8: #{autoencoder_forward.1} parent=1 // pred_region
      _
    $region9: #{autoencoder_forward.1} parent=1 // pred_fallthru
      _
    // Predicated region
    $region10: #{autoencoder_forward.1} parent=1 // pred_check
      _
    $region11: #{autoencoder_forward.1} parent=1 // pred_check_branch
      %18 = sbr.rel (0) target = $region13
    $region12: #{autoencoder_forward.1} parent=1 // pred_region
      _
    $region13: #{autoencoder_forward.1} parent=1 // pred_fallthru
      _
    // Predicated region
    $region14: #{autoencoder_forward.1} parent=1 // pred_check
      _
    $region15: #{autoencoder_forward.1} parent=1 // pred_check_branch
      %20 = sbr.rel (0) target = $region17
    $region16: #{autoencoder_forward.1} parent=1 // pred_region
      _
    $region17: #{autoencoder_forward.1} parent=1 // pred_fallthru
      _
    // Predicated region
    $region18: #{autoencoder_forward.1} parent=1 // pred_check
      _
    $region19: #{autoencoder_forward.1} parent=1 // pred_check_branch
      %22 = sbr.rel (0) target = $region21
    $region20: #{autoencoder_forward.1} parent=1 // pred_region
      _
    $region21: #{autoencoder_forward.1} parent=1 // pred_fallthru
      _
    // Predicated region
    $region22: #{autoencoder_forward.1} parent=1 // pred_check
      _
    $region23: #{autoencoder_forward.1} parent=1 // pred_check_branch
      %24 = sbr.rel (0) target = $region25
    $region24: #{autoencoder_forward.1} parent=1 // pred_region
      _
    $region25: #{autoencoder_forward.1} parent=1 // pred_fallthru
      _
    // Predicated region
    $region26: #{autoencoder_forward.1} parent=1 // pred_check
      _
    $region27: #{autoencoder_forward.1} parent=1 // pred_check_branch
      %26 = sbr.rel (0) target = $region29
    $region28: #{autoencoder_forward.1} parent=1 // pred_region
      _
    $region29: #{autoencoder_forward.1} parent=1 // pred_fallthru
      _
    %v27 = vld [vmem:[%s0] sm:$0xff]
    %v28 = vld [vmem:[%s0 + $0x8] sm:$0xff]
    %v29 = vld [vmem:[%s0 + $0x10] sm:$0xff]
    %v30 = vld [vmem:[%s0 + $0x18] sm:$0xff]
    %v31 = vld [vmem:[%s1] sm:$0xff]
    %v32 = vld [vmem:[%s1 + $0x8] sm:$0xff]
    %v33 = vld [vmem:[%s1 + $0x10] sm:$0xff]
    %v34 = vld [vmem:[%s1 + $0x18] sm:$0xff]
    %v35 = vld [vmem:[%s1 + $0x20] sm:$0xff]
    %v36 = vld [vmem:[%s1 + $0x28] sm:$0xff]
    %v37 = vld [vmem:[%s1 + $0x30] sm:$0xff]
    %v38 = vld [vmem:[%s1 + $0x38] sm:$0xff]
    %v39 = vld [vmem:[%s1 + $0x40] sm:$0xff]
    %v40 = vld [vmem:[%s1 + $0x48] sm:$0xff]
    %v41 = vld [vmem:[%s1 + $0x50] sm:$0xff]
    %v42 = vld [vmem:[%s1 + $0x58] sm:$0xff]
    %v43 = vld [vmem:[%s1 + $0x60] sm:$0xff]
    %v44 = vld [vmem:[%s1 + $0x68] sm:$0xff]
    %v45 = vld [vmem:[%s1 + $0x70] sm:$0xff]
    %v46 = vld [vmem:[%s1 + $0x78] sm:$0xff]
    %v47 = vld [vmem:[%s1 + $0x80] sm:$0xff]
    %v48 = vld [vmem:[%s1 + $0x88] sm:$0xff]
    %v49 = vld [vmem:[%s1 + $0x90] sm:$0xff]
    %v50 = vld [vmem:[%s1 + $0x98] sm:$0xff]
    %v51 = vld [vmem:[%s1 + $0xa0] sm:$0xff]
    %v52 = vld [vmem:[%s1 + $0xa8] sm:$0xff]
    %v53 = vld [vmem:[%s1 + $0xb0] sm:$0xff]
    %v54 = vld [vmem:[%s1 + $0xb8] sm:$0xff]
    %v55 = vld [vmem:[%s1 + $0xc0] sm:$0xff]
    %v56 = vld [vmem:[%s1 + $0xc8] sm:$0xff]
    %v57 = vld [vmem:[%s1 + $0xd0] sm:$0xff]
    %v58 = vld [vmem:[%s1 + $0xd8] sm:$0xff]
    %v59 = vld [vmem:[%s1 + $0xe0] sm:$0xff]
    %v60 = vld [vmem:[%s1 + $0xe8] sm:$0xff]
    %v61 = vld [vmem:[%s1 + $0xf0] sm:$0xff]
    %v62 = vld [vmem:[%s1 + $0xf8] sm:$0xff]
    %v63 = vld [vmem:[%s1 + $0x100] sm:$0xff]
    %v64 = vld [vmem:[%s1 + $0x108] sm:$0xff]
    %v65 = vld [vmem:[%s1 + $0x110] sm:$0xff]
    %v66 = vld [vmem:[%s1 + $0x118] sm:$0xff]
    %v67 = vld [vmem:[%s1 + $0x120] sm:$0xff]
    %v68 = vld [vmem:[%s1 + $0x128] sm:$0xff]
    %v69 = vld [vmem:[%s1 + $0x130] sm:$0xff]
    %v70 = vld [vmem:[%s1 + $0x138] sm:$0xff]
    %v71 = vld [vmem:[%s1 + $0x140] sm:$0xff]
    %v72 = vld [vmem:[%s1 + $0x148] sm:$0xff]
    %v73 = vld [vmem:[%s1 + $0x150] sm:$0xff]
    %v74 = vld [vmem:[%s1 + $0x158] sm:$0xff]
    %v75 = vld [vmem:[%s1 + $0x160] sm:$0xff]
    %v76 = vld [vmem:[%s1 + $0x168] sm:$0xff]
    %v77 = vld [vmem:[%s1 + $0x170] sm:$0xff]
    %v78 = vld [vmem:[%s1 + $0x178] sm:$0xff]
    %v79 = vld [vmem:[%s1 + $0x180] sm:$0xff]
    %v80 = vld [vmem:[%s1 + $0x188] sm:$0xff]
    %v81 = vld [vmem:[%s1 + $0x190] sm:$0xff]
    %v82 = vld [vmem:[%s1 + $0x198] sm:$0xff]
    %v83 = vld [vmem:[%s1 + $0x1a0] sm:$0xff]
    %v84 = vld [vmem:[%s1 + $0x1a8] sm:$0xff]
    %v85 = vld [vmem:[%s1 + $0x1b0] sm:$0xff]
    %v86 = vld [vmem:[%s1 + $0x1b8] sm:$0xff]
    %v87 = vld [vmem:[%s1 + $0x1c0] sm:$0xff]
    %v88 = vld [vmem:[%s1 + $0x1c8] sm:$0xff]
    %v89 = vld [vmem:[%s1 + $0x1d0] sm:$0xff]
    %v90 = vld [vmem:[%s1 + $0x1d8] sm:$0xff]
    %v91 = vld [vmem:[%s1 + $0x1e0] sm:$0xff]
    %v92 = vld [vmem:[%s1 + $0x1e8] sm:$0xff]
    %v93 = vld [vmem:[%s1 + $0x1f0] sm:$0xff]
    %v94 = vld [vmem:[%s1 + $0x1f8] sm:$0xff]
    %v95 = vld [vmem:[%s2] sm:$0x1]
    %v97 = vlaneseq
    %v98 = vshrl.u32 %v97, 7
    %v99 = vsub.s32 0, %v98
    %v100 = vrot.slane %v95, %v99
    %102 = vmatprep.subr.mxu0 0.0
    %103 = vmatpush1.msra.mxu0 %v46
    %104 = vmatprep.subr.mxu0 0.0
    %105 = vmatpush1.msra.mxu0 %v45
    %106 = vmatprep.subr.mxu0 0.0
    %107 = vmatpush1.msra.mxu0 %v44
    %108 = vmatprep.subr.mxu0 0.0
    %109 = vmatpush1.msra.mxu0 %v43
    %110 = vmatprep.subr.mxu0 0.0
    %111 = vmatpush1.msra.mxu0 %v42
    %112 = vmatprep.subr.mxu0 0.0
    %113 = vmatpush1.msra.mxu0 %v41
    %114 = vmatprep.subr.mxu0 0.0
    %115 = vmatpush1.msra.mxu0 %v40
    %116 = vmatprep.subr.mxu0 0.0
    %117 = vmatpush1.msra.mxu0 %v39
    %118 = vmatprep.subr.mxu0 0.0
    %119 = vmatpush1.msra.mxu0 %v38
    %120 = vmatprep.subr.mxu0 0.0
    %121 = vmatpush1.msra.mxu0 %v37
    %122 = vmatprep.subr.mxu0 0.0
    %123 = vmatpush1.msra.mxu0 %v36
    %124 = vmatprep.subr.mxu0 0.0
    %125 = vmatpush1.msra.mxu0 %v35
    %126 = vmatprep.subr.mxu0 0.0
    %127 = vmatpush1.msra.mxu0 %v34
    %128 = vmatprep.subr.mxu0 0.0
    %129 = vmatpush1.msra.mxu0 %v33
    %130 = vmatprep.subr.mxu0 0.0
    %131 = vmatpush1.msra.mxu0 %v32
    %132 = vmatprep.subr.mxu0 0.0
    %133 = vmatpush1.msra.mxu0 %v31
    %134 = vmatprep.subr.mxu0 0.0
    %135 = vmatpush2.msra.mxu0 %v62
    %136 = vmatprep.subr.mxu0 0.0
    %137 = vmatpush2.msra.mxu0 %v61
    %138 = vmatprep.subr.mxu0 0.0
    %139 = vmatpush2.msra.mxu0 %v60
    %140 = vmatprep.subr.mxu0 0.0
    %141 = vmatpush2.msra.mxu0 %v59
    %142 = vmatprep.subr.mxu0 0.0
    %143 = vmatpush2.msra.mxu0 %v58
    %144 = vmatprep.subr.mxu0 0.0
    %145 = vmatpush2.msra.mxu0 %v57
    %146 = vmatprep.subr.mxu0 0.0
    %147 = vmatpush2.msra.mxu0 %v56
    %148 = vmatprep.subr.mxu0 0.0
    %149 = vmatpush2.msra.mxu0 %v55
    %150 = vmatprep.subr.mxu0 0.0
    %151 = vmatpush2.msra.mxu0 %v54
    %152 = vmatprep.subr.mxu0 0.0
    %153 = vmatpush2.msra.mxu0 %v53
    %154 = vmatprep.subr.mxu0 0.0
    %155 = vmatpush2.msra.mxu0 %v52
    %156 = vmatprep.subr.mxu0 0.0
    %157 = vmatpush2.msra.mxu0 %v51
    %158 = vmatprep.subr.mxu0 0.0
    %159 = vmatpush2.msra.mxu0 %v50
    %160 = vmatprep.subr.mxu0 0.0
    %161 = vmatpush2.msra.mxu0 %v49
    %162 = vmatprep.subr.mxu0 0.0
    %163 = vmatpush2.msra.mxu0 %v48
    %164 = vmatprep.subr.mxu0 0.0
    %165 = vmatpush2.msra.mxu0 %v47
    %166 = vmatprep.mubr.f32.mxu0 %v28
    %167 = vmatmul.mubr.f32.gmra.mxu0 %v27
    %v168 = vpop.f32.mrf.mxu0
    %v169 = vadd.f32 %v100, %v168
    %v170 = vpop.f32.mrf.mxu0
    %171 = vdwg.mxu0
    %172 = vmatprep.subr.mxu0 0.0
    %173 = vmatpush1.msra.mxu0 %v78
    %174 = vmatprep.subr.mxu0 0.0
    %175 = vmatpush1.msra.mxu0 %v77
    %176 = vmatprep.subr.mxu0 0.0
    %177 = vmatpush1.msra.mxu0 %v76
    %178 = vmatprep.subr.mxu0 0.0
    %179 = vmatpush1.msra.mxu0 %v75
    %180 = vmatprep.subr.mxu0 0.0
    %181 = vmatpush1.msra.mxu0 %v74
    %182 = vmatprep.subr.mxu0 0.0
    %183 = vmatpush1.msra.mxu0 %v73
    %184 = vmatprep.subr.mxu0 0.0
    %185 = vmatpush1.msra.mxu0 %v72
    %186 = vmatprep.subr.mxu0 0.0
    %187 = vmatpush1.msra.mxu0 %v71
    %188 = vmatprep.subr.mxu0 0.0
    %189 = vmatpush1.msra.mxu0 %v70
    %190 = vmatprep.subr.mxu0 0.0
    %191 = vmatpush1.msra.mxu0 %v69
    %192 = vmatprep.subr.mxu0 0.0
    %193 = vmatpush1.msra.mxu0 %v68
    %194 = vmatprep.subr.mxu0 0.0
    %195 = vmatpush1.msra.mxu0 %v67
    %196 = vmatprep.subr.mxu0 0.0
    %197 = vmatpush1.msra.mxu0 %v66
    %198 = vmatprep.subr.mxu0 0.0
    %199 = vmatpush1.msra.mxu0 %v65
    %200 = vmatprep.subr.mxu0 0.0
    %201 = vmatpush1.msra.mxu0 %v64
    %202 = vmatprep.subr.mxu0 0.0
    %203 = vmatpush1.msra.mxu0 %v63
    %204 = vmatprep.subr.mxu0 0.0
    %205 = vmatpush2.msra.mxu0 %v94
    %206 = vmatprep.subr.mxu0 0.0
    %207 = vmatpush2.msra.mxu0 %v93
    %208 = vmatprep.subr.mxu0 0.0
    %209 = vmatpush2.msra.mxu0 %v92
    %210 = vmatprep.subr.mxu0 0.0
    %211 = vmatpush2.msra.mxu0 %v91
    %212 = vmatprep.subr.mxu0 0.0
    %213 = vmatpush2.msra.mxu0 %v90
    %214 = vmatprep.subr.mxu0 0.0
    %215 = vmatpush2.msra.mxu0 %v89
    %216 = vmatprep.subr.mxu0 0.0
    %217 = vmatpush2.msra.mxu0 %v88
    %218 = vmatprep.subr.mxu0 0.0
    %219 = vmatpush2.msra.mxu0 %v87
    %220 = vmatprep.subr.mxu0 0.0
    %221 = vmatpush2.msra.mxu0 %v86
    %222 = vmatprep.subr.mxu0 0.0
    %223 = vmatpush2.msra.mxu0 %v85
    %224 = vmatprep.subr.mxu0 0.0
    %225 = vmatpush2.msra.mxu0 %v84
    %226 = vmatprep.subr.mxu0 0.0
    %227 = vmatpush2.msra.mxu0 %v83
    %228 = vmatprep.subr.mxu0 0.0
    %229 = vmatpush2.msra.mxu0 %v82
    %230 = vmatprep.subr.mxu0 0.0
    %231 = vmatpush2.msra.mxu0 %v81
    %232 = vmatprep.subr.mxu0 0.0
    %233 = vmatpush2.msra.mxu0 %v80
    %234 = vmatprep.subr.mxu0 0.0
    %235 = vmatpush2.msra.mxu0 %v79
    %236 = vmatprep.mubr.f32.mxu0 %v30
    %237 = vmatmul.mubr.f32.gmra.mxu0 %v29
    %v238 = vpop.f32.mrf.mxu0
    %v239 = vadd.f32 %v169, %v238
    %v240 = vpop.f32.mrf.mxu0
    %241 = vdwg.mxu0
    %v242 = vmax.f32 %v239, 0.0
    %v243 = vld [vmem:[%s3] sm:$0xff]
    %v244 = vld [vmem:[%s3 + $0x8] sm:$0xff]
    %v245 = vld [vmem:[%s3 + $0x10] sm:$0xff]
    %v246 = vld [vmem:[%s3 + $0x18] sm:$0xff]
    %v247 = vld [vmem:[%s3 + $0x20] sm:$0xff]
    %v248 = vld [vmem:[%s3 + $0x28] sm:$0xff]
    %v249 = vld [vmem:[%s3 + $0x30] sm:$0xff]
    %v250 = vld [vmem:[%s3 + $0x38] sm:$0xff]
    %v251 = vld [vmem:[%s3 + $0x40] sm:$0xff]
    %v252 = vld [vmem:[%s3 + $0x48] sm:$0xff]
    %v253 = vld [vmem:[%s3 + $0x50] sm:$0xff]
    %v254 = vld [vmem:[%s3 + $0x58] sm:$0xff]
    %v255 = vld [vmem:[%s3 + $0x60] sm:$0xff]
    %v256 = vld [vmem:[%s3 + $0x68] sm:$0xff]
    %v257 = vld [vmem:[%s3 + $0x70] sm:$0xff]
    %v258 = vld [vmem:[%s3 + $0x78] sm:$0xff]
    %v259 = vld [vmem:[%s4] sm:$0x1]
    %v261 = vlaneseq
    %v262 = vshrl.u32 %v261, 7
    %v263 = vsub.s32 0, %v262
    %v264 = vrot.slane %v259, %v263
    %266 = vmatprep.subr.mxu0 0.0
    %267 = vmatpush1.msra.mxu0 %v258
    %268 = vmatprep.subr.mxu0 0.0
    %269 = vmatpush1.msra.mxu0 %v257
    %270 = vmatprep.subr.mxu0 0.0
    %271 = vmatpush1.msra.mxu0 %v256
    %272 = vmatprep.subr.mxu0 0.0
    %273 = vmatpush1.msra.mxu0 %v255
    %274 = vmatprep.subr.mxu0 0.0
    %275 = vmatpush1.msra.mxu0 %v254
    %276 = vmatprep.subr.mxu0 0.0
    %277 = vmatpush1.msra.mxu0 %v253
    %278 = vmatprep.subr.mxu0 0.0
    %279 = vmatpush1.msra.mxu0 %v252
    %280 = vmatprep.subr.mxu0 0.0
    %281 = vmatpush1.msra.mxu0 %v251
    %282 = vmatprep.subr.mxu0 0.0
    %283 = vmatpush1.msra.mxu0 %v250
    %284 = vmatprep.subr.mxu0 0.0
    %285 = vmatpush1.msra.mxu0 %v249
    %286 = vmatprep.subr.mxu0 0.0
    %287 = vmatpush1.msra.mxu0 %v248
    %288 = vmatprep.subr.mxu0 0.0
    %289 = vmatpush1.msra.mxu0 %v247
    %290 = vmatprep.subr.mxu0 0.0
    %291 = vmatpush1.msra.mxu0 %v246
    %292 = vmatprep.subr.mxu0 0.0
    %293 = vmatpush1.msra.mxu0 %v245
    %294 = vmatprep.subr.mxu0 0.0
    %295 = vmatpush1.msra.mxu0 %v244
    %296 = vmatprep.subr.mxu0 0.0
    %297 = vmatpush1.msra.mxu0 %v243
    %298 = vmatprep.subr.mxu0 0.0
    %299 = vmatpush2.msra.mxu0 0.0
    %300 = vmatprep.subr.mxu0 0.0
    %301 = vmatpush2.msra.mxu0 0.0
    %302 = vmatprep.subr.mxu0 0.0
    %303 = vmatpush2.msra.mxu0 0.0
    %304 = vmatprep.subr.mxu0 0.0
    %305 = vmatpush2.msra.mxu0 0.0
    %306 = vmatprep.subr.mxu0 0.0
    %307 = vmatpush2.msra.mxu0 0.0
    %308 = vmatprep.subr.mxu0 0.0
    %309 = vmatpush2.msra.mxu0 0.0
    %310 = vmatprep.subr.mxu0 0.0
    %311 = vmatpush2.msra.mxu0 0.0
    %312 = vmatprep.subr.mxu0 0.0
    %313 = vmatpush2.msra.mxu0 0.0
    %314 = vmatprep.subr.mxu0 0.0
    %315 = vmatpush2.msra.mxu0 0.0
    %316 = vmatprep.subr.mxu0 0.0
    %317 = vmatpush2.msra.mxu0 0.0
    %318 = vmatprep.subr.mxu0 0.0
    %319 = vmatpush2.msra.mxu0 0.0
    %320 = vmatprep.subr.mxu0 0.0
    %321 = vmatpush2.msra.mxu0 0.0
    %322 = vmatprep.subr.mxu0 0.0
    %323 = vmatpush2.msra.mxu0 0.0
    %324 = vmatprep.subr.mxu0 0.0
    %325 = vmatpush2.msra.mxu0 0.0
    %326 = vmatprep.subr.mxu0 0.0
    %327 = vmatpush2.msra.mxu0 0.0
    %328 = vmatprep.subr.mxu0 0.0
    %329 = vmatpush2.msra.mxu0 0.0
    %330 = vmatprep.mubr.f32.mxu0 0.0
    %331 = vmatmul.mubr.f32.gmra.mxu0 %v242
    %v332 = vpop.f32.mrf.mxu0
    %v333 = vadd.f32 %v264, %v332
    %v334 = vpop.f32.mrf.mxu0
    %335 = vdwg.mxu0
    %v336 = vmax.f32 %v333, 0.0
    %v337 = vld [vmem:[%s5] sm:$0xff]
    %v338 = vld [vmem:[%s5 + $0x8] sm:$0xff]
    %v339 = vld [vmem:[%s5 + $0x10] sm:$0xff]
    %v340 = vld [vmem:[%s5 + $0x18] sm:$0xff]
    %v341 = vld [vmem:[%s5 + $0x20] sm:$0xff]
    %v342 = vld [vmem:[%s5 + $0x28] sm:$0xff]
    %v343 = vld [vmem:[%s5 + $0x30] sm:$0xff]
    %v344 = vld [vmem:[%s5 + $0x38] sm:$0xff]
    %v345 = vld [vmem:[%s5 + $0x40] sm:$0xff]
    %v346 = vld [vmem:[%s5 + $0x48] sm:$0xff]
    %v347 = vld [vmem:[%s5 + $0x50] sm:$0xff]
    %v348 = vld [vmem:[%s5 + $0x58] sm:$0xff]
    %v349 = vld [vmem:[%s5 + $0x60] sm:$0xff]
    %v350 = vld [vmem:[%s5 + $0x68] sm:$0xff]
    %v351 = vld [vmem:[%s5 + $0x70] sm:$0xff]
    %v352 = vld [vmem:[%s5 + $0x78] sm:$0xff]
    %v353 = vld [vmem:[%s5 + $0x80] sm:$0xff]
    %v354 = vld [vmem:[%s5 + $0x88] sm:$0xff]
    %v355 = vld [vmem:[%s5 + $0x90] sm:$0xff]
    %v356 = vld [vmem:[%s5 + $0x98] sm:$0xff]
    %v357 = vld [vmem:[%s5 + $0xa0] sm:$0xff]
    %v358 = vld [vmem:[%s5 + $0xa8] sm:$0xff]
    %v359 = vld [vmem:[%s5 + $0xb0] sm:$0xff]
    %v360 = vld [vmem:[%s5 + $0xb8] sm:$0xff]
    %v361 = vld [vmem:[%s5 + $0xc0] sm:$0xff]
    %v362 = vld [vmem:[%s5 + $0xc8] sm:$0xff]
    %v363 = vld [vmem:[%s5 + $0xd0] sm:$0xff]
    %v364 = vld [vmem:[%s5 + $0xd8] sm:$0xff]
    %v365 = vld [vmem:[%s5 + $0xe0] sm:$0xff]
    %v366 = vld [vmem:[%s5 + $0xe8] sm:$0xff]
    %v367 = vld [vmem:[%s5 + $0xf0] sm:$0xff]
    %v368 = vld [vmem:[%s5 + $0xf8] sm:$0xff]
    %v369 = vld [vmem:[%s5 + $0x100] sm:$0xff]
    %v370 = vld [vmem:[%s5 + $0x108] sm:$0xff]
    %v371 = vld [vmem:[%s5 + $0x110] sm:$0xff]
    %v372 = vld [vmem:[%s5 + $0x118] sm:$0xff]
    %v373 = vld [vmem:[%s5 + $0x120] sm:$0xff]
    %v374 = vld [vmem:[%s5 + $0x128] sm:$0xff]
    %v375 = vld [vmem:[%s5 + $0x130] sm:$0xff]
    %v376 = vld [vmem:[%s5 + $0x138] sm:$0xff]
    %v377 = vld [vmem:[%s5 + $0x140] sm:$0xff]
    %v378 = vld [vmem:[%s5 + $0x148] sm:$0xff]
    %v379 = vld [vmem:[%s5 + $0x150] sm:$0xff]
    %v380 = vld [vmem:[%s5 + $0x158] sm:$0xff]
    %v381 = vld [vmem:[%s5 + $0x160] sm:$0xff]
    %v382 = vld [vmem:[%s5 + $0x168] sm:$0xff]
    %v383 = vld [vmem:[%s5 + $0x170] sm:$0xff]
    %v384 = vld [vmem:[%s5 + $0x178] sm:$0xff]
    %v385 = vld [vmem:[%s5 + $0x180] sm:$0xff]
    %v386 = vld [vmem:[%s5 + $0x188] sm:$0xff]
    %v387 = vld [vmem:[%s5 + $0x190] sm:$0xff]
    %v388 = vld [vmem:[%s5 + $0x198] sm:$0xff]
    %v389 = vld [vmem:[%s5 + $0x1a0] sm:$0xff]
    %v390 = vld [vmem:[%s5 + $0x1a8] sm:$0xff]
    %v391 = vld [vmem:[%s5 + $0x1b0] sm:$0xff]
    %v392 = vld [vmem:[%s5 + $0x1b8] sm:$0xff]
    %v393 = vld [vmem:[%s5 + $0x1c0] sm:$0xff]
    %v394 = vld [vmem:[%s5 + $0x1c8] sm:$0xff]
    %v395 = vld [vmem:[%s5 + $0x1d0] sm:$0xff]
    %v396 = vld [vmem:[%s5 + $0x1d8] sm:$0xff]
    %v397 = vld [vmem:[%s5 + $0x1e0] sm:$0xff]
    %v398 = vld [vmem:[%s5 + $0x1e8] sm:$0xff]
    %v399 = vld [vmem:[%s5 + $0x1f0] sm:$0xff]
    %v400 = vld [vmem:[%s5 + $0x1f8] sm:$0xff]
    %v401 = vld [vmem:[%s6] sm:$0xf]
    %v403 = vlaneseq
    %v404 = vshrl.u32 %v403, 7
    %v405 = vsub.s32 0, %v404
    %v406 = vrot.slane %v401, %v405
    %v407 = vlaneseq
    %v408 = vshrl.u32 %v407, 7
    %v409 = vsub.s32 1, %v408
    %v410 = vrot.slane %v401, %v409
    %v411 = vlaneseq
    %v412 = vshrl.u32 %v411, 7
    %v413 = vsub.s32 2, %v412
    %v414 = vrot.slane %v401, %v413
    %v415 = vlaneseq
    %v416 = vshrl.u32 %v415, 7
    %v417 = vsub.s32 3, %v416
    %v418 = vrot.slane %v401, %v417
    %423 = vmatprep.subr.mxu0 %v398
    %424 = vmatpush1.msra.mxu0 %v397
    %425 = vmatprep.subr.mxu0 %v394
    %426 = vmatpush1.msra.mxu0 %v393
    %427 = vmatprep.subr.mxu0 %v390
    %428 = vmatpush1.msra.mxu0 %v389
    %429 = vmatprep.subr.mxu0 %v386
    %430 = vmatpush1.msra.mxu0 %v385
    %431 = vmatprep.subr.mxu0 %v382
    %432 = vmatpush1.msra.mxu0 %v381
    %433 = vmatprep.subr.mxu0 %v378
    %434 = vmatpush1.msra.mxu0 %v377
    %435 = vmatprep.subr.mxu0 %v374
    %436 = vmatpush1.msra.mxu0 %v373
    %437 = vmatprep.subr.mxu0 %v370
    %438 = vmatpush1.msra.mxu0 %v369
    %439 = vmatprep.subr.mxu0 %v366
    %440 = vmatpush1.msra.mxu0 %v365
    %441 = vmatprep.subr.mxu0 %v362
    %442 = vmatpush1.msra.mxu0 %v361
    %443 = vmatprep.subr.mxu0 %v358
    %444 = vmatpush1.msra.mxu0 %v357
    %445 = vmatprep.subr.mxu0 %v354
    %446 = vmatpush1.msra.mxu0 %v353
    %447 = vmatprep.subr.mxu0 %v350
    %448 = vmatpush1.msra.mxu0 %v349
    %449 = vmatprep.subr.mxu0 %v346
    %450 = vmatpush1.msra.mxu0 %v345
    %451 = vmatprep.subr.mxu0 %v342
    %452 = vmatpush1.msra.mxu0 %v341
    %453 = vmatprep.subr.mxu0 %v338
    %454 = vmatpush1.msra.mxu0 %v337
    %455 = vmatprep.subr.mxu0 0.0
    %456 = vmatpush2.msra.mxu0 0.0
    %457 = vmatprep.subr.mxu0 0.0
    %458 = vmatpush2.msra.mxu0 0.0
    %459 = vmatprep.subr.mxu0 0.0
    %460 = vmatpush2.msra.mxu0 0.0
    %461 = vmatprep.subr.mxu0 0.0
    %462 = vmatpush2.msra.mxu0 0.0
    %463 = vmatprep.subr.mxu0 0.0
    %464 = vmatpush2.msra.mxu0 0.0
    %465 = vmatprep.subr.mxu0 0.0
    %466 = vmatpush2.msra.mxu0 0.0
    %467 = vmatprep.subr.mxu0 0.0
    %468 = vmatpush2.msra.mxu0 0.0
    %469 = vmatprep.subr.mxu0 0.0
    %470 = vmatpush2.msra.mxu0 0.0
    %471 = vmatprep.subr.mxu0 0.0
    %472 = vmatpush2.msra.mxu0 0.0
    %473 = vmatprep.subr.mxu0 0.0
    %474 = vmatpush2.msra.mxu0 0.0
    %475 = vmatprep.subr.mxu0 0.0
    %476 = vmatpush2.msra.mxu0 0.0
    %477 = vmatprep.subr.mxu0 0.0
    %478 = vmatpush2.msra.mxu0 0.0
    %479 = vmatprep.subr.mxu0 0.0
    %480 = vmatpush2.msra.mxu0 0.0
    %481 = vmatprep.subr.mxu0 0.0
    %482 = vmatpush2.msra.mxu0 0.0
    %483 = vmatprep.subr.mxu0 0.0
    %484 = vmatpush2.msra.mxu0 0.0
    %485 = vmatprep.subr.mxu0 0.0
    %486 = vmatpush2.msra.mxu0 0.0
    %487 = vmatprep.mubr.f32.mxu0 0.0
    %488 = vmatmul.mubr.f32.gmra.mxu0 %v336
    %v489 = vpop.f32.mrf.mxu0
    %v490 = vadd.f32 %v406, %v489
    %v491 = vpop.f32.mrf.mxu0
    %v492 = vadd.f32 %v410, %v491
    %493 = vdwg.mxu0
    %494 = vmatprep.subr.mxu0 %v400
    %495 = vmatpush1.msra.mxu0 %v399
    %496 = vmatprep.subr.mxu0 %v396
    %497 = vmatpush1.msra.mxu0 %v395
    %498 = vmatprep.subr.mxu0 %v392
    %499 = vmatpush1.msra.mxu0 %v391
    %500 = vmatprep.subr.mxu0 %v388
    %501 = vmatpush1.msra.mxu0 %v387
    %502 = vmatprep.subr.mxu0 %v384
    %503 = vmatpush1.msra.mxu0 %v383
    %504 = vmatprep.subr.mxu0 %v380
    %505 = vmatpush1.msra.mxu0 %v379
    %506 = vmatprep.subr.mxu0 %v376
    %507 = vmatpush1.msra.mxu0 %v375
    %508 = vmatprep.subr.mxu0 %v372
    %509 = vmatpush1.msra.mxu0 %v371
    %510 = vmatprep.subr.mxu0 %v368
    %511 = vmatpush1.msra.mxu0 %v367
    %512 = vmatprep.subr.mxu0 %v364
    %513 = vmatpush1.msra.mxu0 %v363
    %514 = vmatprep.subr.mxu0 %v360
    %515 = vmatpush1.msra.mxu0 %v359
    %516 = vmatprep.subr.mxu0 %v356
    %517 = vmatpush1.msra.mxu0 %v355
    %518 = vmatprep.subr.mxu0 %v352
    %519 = vmatpush1.msra.mxu0 %v351
    %520 = vmatprep.subr.mxu0 %v348
    %521 = vmatpush1.msra.mxu0 %v347
    %522 = vmatprep.subr.mxu0 %v344
    %523 = vmatpush1.msra.mxu0 %v343
    %524 = vmatprep.subr.mxu0 %v340
    %525 = vmatpush1.msra.mxu0 %v339
    %526 = vmatprep.subr.mxu0 0.0
    %527 = vmatpush2.msra.mxu0 0.0
    %528 = vmatprep.subr.mxu0 0.0
    %529 = vmatpush2.msra.mxu0 0.0
    %530 = vmatprep.subr.mxu0 0.0
    %531 = vmatpush2.msra.mxu0 0.0
    %532 = vmatprep.subr.mxu0 0.0
    %533 = vmatpush2.msra.mxu0 0.0
    %534 = vmatprep.subr.mxu0 0.0
    %535 = vmatpush2.msra.mxu0 0.0
    %536 = vmatprep.subr.mxu0 0.0
    %537 = vmatpush2.msra.mxu0 0.0
    %538 = vmatprep.subr.mxu0 0.0
    %539 = vmatpush2.msra.mxu0 0.0
    %540 = vmatprep.subr.mxu0 0.0
    %541 = vmatpush2.msra.mxu0 0.0
    %542 = vmatprep.subr.mxu0 0.0
    %543 = vmatpush2.msra.mxu0 0.0
    %544 = vmatprep.subr.mxu0 0.0
    %545 = vmatpush2.msra.mxu0 0.0
    %546 = vmatprep.subr.mxu0 0.0
    %547 = vmatpush2.msra.mxu0 0.0
    %548 = vmatprep.subr.mxu0 0.0
    %549 = vmatpush2.msra.mxu0 0.0
    %550 = vmatprep.subr.mxu0 0.0
    %551 = vmatpush2.msra.mxu0 0.0
    %552 = vmatprep.subr.mxu0 0.0
    %553 = vmatpush2.msra.mxu0 0.0
    %554 = vmatprep.subr.mxu0 0.0
    %555 = vmatpush2.msra.mxu0 0.0
    %556 = vmatprep.subr.mxu0 0.0
    %557 = vmatpush2.msra.mxu0 0.0
    %558 = vmatprep.mubr.f32.mxu0 0.0
    %559 = vmatmul.mubr.f32.gmra.mxu0 %v336
    %v560 = vpop.f32.mrf.mxu0
    %v561 = vadd.f32 %v414, %v560
    %v562 = vpop.f32.mrf.mxu0
    %v563 = vadd.f32 %v418, %v562
    %564 = vdwg.mxu0
    %565 = vst [vmem:[#allocation2] sm:$0xff] %v490
    %566 = vst [vmem:[#allocation2 + $0x8] sm:$0xff] %v492
    %567 = vst [vmem:[#allocation2 + $0x10] sm:$0xff] %v561
    %568 = vst [vmem:[#allocation2 + $0x18] sm:$0xff] %v563
    // Predicated region
    $region30: #{autoencoder_forward.1} parent=1 // pred_check
      _
    $region31: #{autoencoder_forward.1} parent=1 // pred_check_branch
      %570 = sbr.rel (0) target = $region33
    $region32: #{autoencoder_forward.1} parent=1 // pred_region
      %s572 = ssub.s32 512, 512
      %573 = vsyncadd [#allocation3], %s572
      %s575 = sshll.u32 [#allocation2], 4
      %s576 = int_to_ptr.vmem [resolvable:$true] %s575
      %578 = dma.vmem_to_hbm [thread:$0]  %s576, 512, %s7, [#allocation3]
    $region33: #{autoencoder_forward.1} parent=1 // pred_fallthru
      _
    // Predicated region
    $region34: #{autoencoder_forward.1} parent=1 // pred_check
      _
    $region35: #{autoencoder_forward.1} parent=1 // pred_check_branch
      %580 = sbr.rel (0) target = $region37
    $region36: #{autoencoder_forward.1} parent=1 // pred_region
      %581 = dma.done [#allocation3], 512
    $region37: #{autoencoder_forward.1} parent=1 // pred_fallthru
      _
    %582 = vsyncpa [#allocation3], 1

</llo_original>
